<compile_context>
chip_gen: v7x
topology: tpu7x:2x2x1
jax: 0.10.0
libtpu: 0.0.40
codegen_flags: <defaults>
</compile_context>

<pallas_src>
import functools

import jax
import jax.numpy as jnp
from jax.experimental import pallas as pl
from jax.experimental.pallas import tpu as pltpu


def ps_dqn_kernel(x_ref, w1_ref, b1_ref, w2_ref, b2_ref, wq_ref, bq_ref, out_ref):
    # x_ref:   (F_in, Bt)   activations, batch on the lane axis
    # w1_ref:  (H1, F_in),  b1_ref: (H1, 1)
    # w2_ref:  (H2, H1),    b2_ref: (H2, 1)
    # wq_ref:  (ADp, H2),   bq_ref: (ADp, 1)   # ADp = A*D padded to sublane mult of 8
    # out_ref: (ADp, Bt)                        # lane-dense, unmasked stores
    x = x_ref[...]

    # Shared feature extraction (transposed): Linear -> ReLU -> Linear -> ReLU
    h1 = jnp.dot(w1_ref[...], x, preferred_element_type=jnp.float32) + b1_ref[...]
    h1 = jnp.maximum(h1, 0.0)
    h2 = jnp.dot(w2_ref[...], h1, preferred_element_type=jnp.float32) + b2_ref[...]
    h2 = jnp.maximum(h2, 0.0)

    # All agent heads fused into one MXU pass.
    q = jnp.dot(wq_ref[...], h2, preferred_element_type=jnp.float32) + bq_ref[...]
    out_ref[...] = q.astype(out_ref.dtype)


def _round_up(x, m):
    return -(-x // m) * m


def prepare_params(params):
    """One-time parameter prep: transpose / fold head weights / pad sublanes.

    Hoisted out of the per-call forward path (perf review item 4).
    """
    w1, b1, w2, b2, wq, bq = params
    A, H2, D = wq.shape
    AD = A * D
    ADp = _round_up(AD, 8)

    w1t = jnp.asarray(w1).T                       # (H1, F_in)
    b1c = jnp.asarray(b1).reshape(-1, 1)          # (H1, 1)
    w2t = jnp.asarray(w2).T                       # (H2, H1)
    b2c = jnp.asarray(b2).reshape(-1, 1)          # (H2, 1)

    # wq (A, H2, D) -> (A*D, H2) with row index a*D + d matching q[b, a, d].
    wqt = jnp.transpose(wq, (0, 2, 1)).reshape(AD, H2)
    bqc = jnp.asarray(bq).reshape(AD, 1)
    if ADp != AD:
        wqt = jnp.pad(wqt, ((0, ADp - AD), (0, 0)))
        bqc = jnp.pad(bqc, ((0, ADp - AD), (0, 0)))

    return (w1t, b1c, w2t, b2c, wqt, bqc)


@functools.partial(jax.jit,
                   static_argnames=("num_agents", "action_dim", "max_batch_tile"))
def ma_ps_dqn_forward(states, prepared_params, *, num_agents, action_dim,
                      max_batch_tile=2048):
    w1t, b1c, w2t, b2c, wqt, bqc = prepared_params
    B, F_in = states.shape
    ADp = wqt.shape[0]
    AD = num_agents * action_dim

    # --- batch tiling -------------------------------------------------------
    # Batch lives on the lane axis -> tile must be a multiple of 128.
    # Large default tile amortizes per-grid-step overhead; target >=2 grid
    # steps for moderate batches so v7x's two TensorCores both get work.
    max_tile = max(128, (max_batch_tile // 128) * 128)
    b_min = _round_up(B, 128)
    bt = min(max_tile, max(128, _round_up(-(-b_min // 2), 128)))
    b_pad = _round_up(B, bt)
    grid = (b_pad // bt,)

    # Transpose + pad the input (lane-dense input DMA inside the kernel).
    x_t = jnp.transpose(states)                   # (F_in, B)
    if b_pad != B:
        x_t = jnp.pad(x_t, ((0, 0), (0, b_pad - B)))

    # Weights: constant block index -> pipeliner keeps them VMEM-resident.
    const = lambda arr: pl.BlockSpec(arr.shape, lambda i: (0,) * arr.ndim)

    q_t = pl.pallas_call(
        ps_dqn_kernel,
        out_shape=jax.ShapeDtypeStruct((ADp, b_pad), jnp.float32),
        grid=grid,
        in_specs=[
            pl.BlockSpec((F_in, bt), lambda i: (0, i)),   # activations tiled over batch
            const(w1t),
            const(b1c),
            const(w2t),
            const(b2c),
            const(wqt),
            const(bqc),
        ],
        out_specs=pl.BlockSpec((ADp, bt), lambda i: (0, i)),
        compiler_params=pltpu.CompilerParams(
            dimension_semantics=("parallel",),            # megacore batch split on v7x
        ),
    )(x_t, w1t, b1c, w2t, b2c, wqt, bqc)

    # Strip padding (both the zero sublane rows and the zero batch columns)
    # and restore the (B, A, D) stacked-head layout.  Fuses under jit.
    return q_t[:AD, :B].T.reshape(B, num_agents, action_dim)


def init_params(key, in_dim, hidden_dim, hidden_dim2, num_agents, action_dim):
    """Deterministic synthetic init mimicking nn.Linear's uniform(-1/sqrt(fan_in), ...)."""
    ks = jax.random.split(key, 6)
    u = lambda k, shape, fan_in: jax.random.uniform(
        k, shape, jnp.float32, -1.0 / jnp.sqrt(fan_in), 1.0 / jnp.sqrt(fan_in))
    w1 = u(ks[0], (in_dim, hidden_dim), in_dim)
    b1 = u(ks[1], (1, hidden_dim), in_dim)
    w2 = u(ks[2], (hidden_dim, hidden_dim2), hidden_dim)
    b2 = u(ks[3], (1, hidden_dim2), hidden_dim)
    wq = u(ks[4], (num_agents, hidden_dim2, action_dim), hidden_dim2)
    bq = u(ks[5], (num_agents, action_dim), hidden_dim2)
    return w1, b1, w2, b2, wq, bq


def reference_forward(states, params):
    """Pure-JAX reference matching the PyTorch module semantics."""
    w1, b1, w2, b2, wq, bq = params
    h1 = jnp.maximum(states @ w1 + b1, 0.0)
    h2 = jnp.maximum(h1 @ w2 + b2, 0.0)
    q = jnp.einsum("bh,ahd->bad", h2, wq) + bq[None]
    return q


if __name__ == "__main__":
    # Small shapes consistent with the module's constructor:
    # num_link=4, num_link_fea=4 -> in_dim=16; hidden_dim=hidden_dim2=32;
    # num_agents=3; action_dim=5; batch=8.
    batch = 8
    num_link, num_link_fea = 4, 4
    in_dim = num_link * num_link_fea
    hidden_dim, hidden_dim2 = 32, 32
    num_agents, action_dim = 3, 5

    key = jax.random.PRNGKey(0)
    k_x, k_p = jax.random.split(key)
    states = jax.random.normal(k_x, (batch, in_dim), jnp.float32)
    params = init_params(k_p, in_dim, hidden_dim, hidden_dim2,
                         num_agents, action_dim)
    prepped = prepare_params(params)

    q = ma_ps_dqn_forward(states, prepped,
                          num_agents=num_agents, action_dim=action_dim)
    q = jax.block_until_ready(q)

    q_ref = reference_forward(states, params)
    assert q.shape == (batch, num_agents, action_dim)
    assert jnp.allclose(q, q_ref, atol=1e-5, rtol=1e-5), "mismatch vs reference"

    # Batch that is not a tile multiple (exercises the lane-padding path).
    k_x2 = jax.random.fold_in(k_x, 1)
    states2 = jax.random.normal(k_x2, (37, in_dim), jnp.float32)
    q2 = jax.block_until_ready(
        ma_ps_dqn_forward(states2, prepped,
                          num_agents=num_agents, action_dim=action_dim))
    q2_ref = reference_forward(states2, params)
    assert q2.shape == (37, num_agents, action_dim)
    assert jnp.allclose(q2, q2_ref, atol=1e-5, rtol=1e-5), \
        "mismatch vs reference (padded batch)"

    # Moderate batch with a small tile cap -> multi-step grid (pipelined loop).
    k_x3 = jax.random.fold_in(k_x, 2)
    states3 = jax.random.normal(k_x3, (300, in_dim), jnp.float32)
    q3 = jax.block_until_ready(
        ma_ps_dqn_forward(states3, prepped,
                          num_agents=num_agents, action_dim=action_dim,
                          max_batch_tile=128))
    q3_ref = reference_forward(states3, params)
    assert q3.shape == (300, num_agents, action_dim)
    assert jnp.allclose(q3, q3_ref, atol=1e-5, rtol=1e-5), \
        "mismatch vs reference (multi-tile grid)"

    print("KERNEL_OK")
</pallas_src>

<mosaic_0001>
module attributes {stable_mosaic.version = 11 : i64} {
  func.func @ps_dqn_kernel(%arg0: i32, %arg1: memref<16x128xf32, #tpu.memory_space<vmem>>, %arg2: memref<32x16xf32, #tpu.memory_space<vmem>>, %arg3: memref<32x1xf32, #tpu.memory_space<vmem>>, %arg4: memref<32x32xf32, #tpu.memory_space<vmem>>, %arg5: memref<32x1xf32, #tpu.memory_space<vmem>>, %arg6: memref<16x32xf32, #tpu.memory_space<vmem>>, %arg7: memref<16x1xf32, #tpu.memory_space<vmem>>, %arg8: memref<16x128xf32, #tpu.memory_space<vmem>>) attributes {dimension_semantics = [#tpu.dimension_semantics<parallel>], iteration_bounds = array<i64: 1>, scalar_prefetch = 0 : i64, scratch_operands = 0 : i64, tpu.core_type = #tpu.core_type<tc>, window_params = [{transform_indices = @transform_0, window_bounds = array<i64: 16, 128>}, {pipeline_mode = #tpu.pipeline_mode<synchronous>, transform_indices = @transform_1, window_bounds = array<i64: 32, 16>}, {pipeline_mode = #tpu.pipeline_mode<synchronous>, transform_indices = @transform_2, window_bounds = array<i64: 32, 1>}, {pipeline_mode = #tpu.pipeline_mode<synchronous>, transform_indices = @transform_3, window_bounds = array<i64: 32, 32>}, {pipeline_mode = #tpu.pipeline_mode<synchronous>, transform_indices = @transform_4, window_bounds = array<i64: 32, 1>}, {pipeline_mode = #tpu.pipeline_mode<synchronous>, transform_indices = @transform_5, window_bounds = array<i64: 16, 32>}, {pipeline_mode = #tpu.pipeline_mode<synchronous>, transform_indices = @transform_6, window_bounds = array<i64: 16, 1>}, {transform_indices = @transform_7, window_bounds = array<i64: 16, 128>}]} {
    %c0 = arith.constant 0 : index
    %c0_0 = arith.constant 0 : index
    %0 = vector.load %arg1[%c0, %c0_0] : memref<16x128xf32, #tpu.memory_space<vmem>>, vector<16x128xf32>
    %c0_1 = arith.constant 0 : index
    %c0_2 = arith.constant 0 : index
    %1 = vector.load %arg2[%c0_1, %c0_2] : memref<32x16xf32, #tpu.memory_space<vmem>>, vector<32x16xf32>
    %cst = arith.constant dense<0.000000e+00> : vector<32x128xf32>
    %2 = tpu.matmul %1, %0, %cst {dimension_numbers = #tpu.dot_dimension_numbers<[1], [0], [0], [1], [0, 0, 1, 1], [], []>} : vector<32x16xf32>, vector<16x128xf32>, vector<32x128xf32> -> vector<32x128xf32>
    %c0_3 = arith.constant 0 : index
    %c0_4 = arith.constant 0 : index
    %3 = vector.load %arg3[%c0_3, %c0_4] : memref<32x1xf32, #tpu.memory_space<vmem>>, vector<32x1xf32>
    %4 = vector.broadcast %3 : vector<32x1xf32> to vector<32x128xf32>
    %5 = arith.addf %2, %4 : vector<32x128xf32>
    %cst_5 = arith.constant 0.000000e+00 : f32
    %6 = vector.broadcast %cst_5 : f32 to vector<32x128xf32>
    %7 = arith.maximumf %5, %6 : vector<32x128xf32>
    %c0_6 = arith.constant 0 : index
    %c0_7 = arith.constant 0 : index
    %8 = vector.load %arg4[%c0_6, %c0_7] : memref<32x32xf32, #tpu.memory_space<vmem>>, vector<32x32xf32>
    %cst_8 = arith.constant dense<0.000000e+00> : vector<32x128xf32>
    %9 = tpu.matmul %8, %7, %cst_8 {dimension_numbers = #tpu.dot_dimension_numbers<[1], [0], [0], [1], [0, 0, 1, 1], [], []>} : vector<32x32xf32>, vector<32x128xf32>, vector<32x128xf32> -> vector<32x128xf32>
    %c0_9 = arith.constant 0 : index
    %c0_10 = arith.constant 0 : index
    %10 = vector.load %arg5[%c0_9, %c0_10] : memref<32x1xf32, #tpu.memory_space<vmem>>, vector<32x1xf32>
    %11 = vector.broadcast %10 : vector<32x1xf32> to vector<32x128xf32>
    %12 = arith.addf %9, %11 : vector<32x128xf32>
    %cst_11 = arith.constant 0.000000e+00 : f32
    %13 = vector.broadcast %cst_11 : f32 to vector<32x128xf32>
    %14 = arith.maximumf %12, %13 : vector<32x128xf32>
    %c0_12 = arith.constant 0 : index
    %c0_13 = arith.constant 0 : index
    %15 = vector.load %arg6[%c0_12, %c0_13] : memref<16x32xf32, #tpu.memory_space<vmem>>, vector<16x32xf32>
    %cst_14 = arith.constant dense<0.000000e+00> : vector<16x128xf32>
    %16 = tpu.matmul %15, %14, %cst_14 {dimension_numbers = #tpu.dot_dimension_numbers<[1], [0], [0], [1], [0, 0, 1, 1], [], []>} : vector<16x32xf32>, vector<32x128xf32>, vector<16x128xf32> -> vector<16x128xf32>
    %c0_15 = arith.constant 0 : index
    %c0_16 = arith.constant 0 : index
    %17 = vector.load %arg7[%c0_15, %c0_16] : memref<16x1xf32, #tpu.memory_space<vmem>>, vector<16x1xf32>
    %18 = vector.broadcast %17 : vector<16x1xf32> to vector<16x128xf32>
    %19 = arith.addf %16, %18 : vector<16x128xf32>
    %c0_17 = arith.constant 0 : index
    %c0_18 = arith.constant 0 : index
    %20 = vector.load %arg8[%c0_17, %c0_18] : memref<16x128xf32, #tpu.memory_space<vmem>>, vector<16x128xf32>
    tpu.vector_store %arg8[%c0_17, %c0_18], %19 {strides = array<i32>} : memref<16x128xf32, #tpu.memory_space<vmem>>, vector<16x128xf32>,
    return
  }
  func.func @transform_0(%arg0: i32) -> (i32, i32) {
    %c0_i32 = arith.constant 0 : i32
    %c0_i32_0 = arith.constant 0 : i32
    return %c0_i32, %arg0 : i32, i32
  }
  func.func @transform_1(%arg0: i32) -> (i32, i32) {
    %c0_i32 = arith.constant 0 : i32
    %c0_i32_0 = arith.constant 0 : i32
    %c0_i32_1 = arith.constant 0 : i32
    return %c0_i32, %c0_i32_0 : i32, i32
  }
  func.func @transform_2(%arg0: i32) -> (i32, i32) {
    %c0_i32 = arith.constant 0 : i32
    %c0_i32_0 = arith.constant 0 : i32
    %c0_i32_1 = arith.constant 0 : i32
    return %c0_i32, %c0_i32_0 : i32, i32
  }
  func.func @transform_3(%arg0: i32) -> (i32, i32) {
    %c0_i32 = arith.constant 0 : i32
    %c0_i32_0 = arith.constant 0 : i32
    %c0_i32_1 = arith.constant 0 : i32
    return %c0_i32, %c0_i32_0 : i32, i32
  }
  func.func @transform_4(%arg0: i32) -> (i32, i32) {
    %c0_i32 = arith.constant 0 : i32
    %c0_i32_0 = arith.constant 0 : i32
    %c0_i32_1 = arith.constant 0 : i32
    return %c0_i32, %c0_i32_0 : i32, i32
  }
  func.func @transform_5(%arg0: i32) -> (i32, i32) {
    %c0_i32 = arith.constant 0 : i32
    %c0_i32_0 = arith.constant 0 : i32
    %c0_i32_1 = arith.constant 0 : i32
    return %c0_i32, %c0_i32_0 : i32, i32
  }
  func.func @transform_6(%arg0: i32) -> (i32, i32) {
    %c0_i32 = arith.constant 0 : i32
    %c0_i32_0 = arith.constant 0 : i32
    %c0_i32_1 = arith.constant 0 : i32
    return %c0_i32, %c0_i32_0 : i32, i32
  }
  func.func @transform_7(%arg0: i32) -> (i32, i32) {
    %c0_i32 = arith.constant 0 : i32
    %c0_i32_0 = arith.constant 0 : i32
    return %c0_i32, %arg0 : i32, i32
  }
}

</mosaic_0001>

<llo_original>
// kernel: ma_ps_dqn_forward.1
$region0: #{ma_ps_dqn_forward.1}
  #allocation0 [shape = 'u32[]', space=smem, size = 0x4, offset = 0x4, fixed_abs, tag = 'smem constant byte address 0x4 - core index']
  #allocation1 [shape = 'u32[144,128]{1,0:T(1,128)}', space=vmem, size = 0x12000, scoped, tag = 'internal scratch']
  %s0 = inlined_call_operand.vmem [shape: f32[16,128], index: 0, kind: input, shape index: {}]
  %s1 = inlined_call_operand.vmem [shape: f32[32,16], index: 1, kind: input, shape index: {}]
  %s2 = inlined_call_operand.vmem [shape: f32[32,1], index: 2, kind: input, shape index: {}]
  %s3 = inlined_call_operand.vmem [shape: f32[32,32], index: 3, kind: input, shape index: {}]
  %s4 = inlined_call_operand.vmem [shape: f32[32,1], index: 4, kind: input, shape index: {}]
  %s5 = inlined_call_operand.vmem [shape: f32[16,32], index: 5, kind: input, shape index: {}]
  %s6 = inlined_call_operand.vmem [shape: f32[16,1], index: 6, kind: input, shape index: {}]
  %s7 = inlined_call_operand.vmem [shape: f32[16,128], index: 7, kind: output, shape index: {}]
  %s8 = sld [smem:[#allocation0]]
  $region38: #{ma_ps_dqn_forward.1} parent=0
    _
  %s10 = ssub.s32 1, %s8
  %s11 = scalar_select 0, %s10, %s8
  // Predicated region
  $region2: #{ma_ps_dqn_forward.1} parent=0 // pred_check
    _
  $region3: #{ma_ps_dqn_forward.1} parent=0 // pred_check_branch
    %13 = sbr.rel (0) target = $region5
  $region4: #{ma_ps_dqn_forward.1} parent=0 // pred_region
    _
  $region5: #{ma_ps_dqn_forward.1} parent=0 // pred_fallthru
    _
  // Predicated region
  $region6: #{ma_ps_dqn_forward.1} parent=0 // pred_check
    _
  $region7: #{ma_ps_dqn_forward.1} parent=0 // pred_check_branch
    %15 = sbr.rel (0) target = $region9
  $region8: #{ma_ps_dqn_forward.1} parent=0 // pred_region
    _
  $region9: #{ma_ps_dqn_forward.1} parent=0 // pred_fallthru
    _
  // Predicated region
  $region10: #{ma_ps_dqn_forward.1} parent=0 // pred_check
    _
  $region11: #{ma_ps_dqn_forward.1} parent=0 // pred_check_branch
    %17 = sbr.rel (0) target = $region13
  $region12: #{ma_ps_dqn_forward.1} parent=0 // pred_region
    _
  $region13: #{ma_ps_dqn_forward.1} parent=0 // pred_fallthru
    _
  // Predicated region
  $region14: #{ma_ps_dqn_forward.1} parent=0 // pred_check
    _
  $region15: #{ma_ps_dqn_forward.1} parent=0 // pred_check_branch
    %19 = sbr.rel (0) target = $region17
  $region16: #{ma_ps_dqn_forward.1} parent=0 // pred_region
    _
  $region17: #{ma_ps_dqn_forward.1} parent=0 // pred_fallthru
    _
  // Predicated region
  $region18: #{ma_ps_dqn_forward.1} parent=0 // pred_check
    _
  $region19: #{ma_ps_dqn_forward.1} parent=0 // pred_check_branch
    %21 = sbr.rel (0) target = $region21
  $region20: #{ma_ps_dqn_forward.1} parent=0 // pred_region
    _
  $region21: #{ma_ps_dqn_forward.1} parent=0 // pred_fallthru
    _
  // Predicated region
  $region22: #{ma_ps_dqn_forward.1} parent=0 // pred_check
    _
  $region23: #{ma_ps_dqn_forward.1} parent=0 // pred_check_branch
    %23 = sbr.rel (0) target = $region25
  $region24: #{ma_ps_dqn_forward.1} parent=0 // pred_region
    _
  $region25: #{ma_ps_dqn_forward.1} parent=0 // pred_fallthru
    _
  // Predicated region
  $region26: #{ma_ps_dqn_forward.1} parent=0 // pred_check
    _
  $region27: #{ma_ps_dqn_forward.1} parent=0 // pred_check_branch
    %25 = sbr.rel (0) target = $region29
  $region28: #{ma_ps_dqn_forward.1} parent=0 // pred_region
    _
  $region29: #{ma_ps_dqn_forward.1} parent=0 // pred_fallthru
    _
  %v26 = vld [vmem:[%s0] sm:$0xff]
  %v27 = vld [vmem:[%s0 + $0x8] sm:$0xff]
  %v28 = vld [vmem:[%s1] sm:$0xff]
  %v29 = vld [vmem:[%s1 + $0x8] sm:$0xff]
  %v30 = vld [vmem:[%s1 + $0x10] sm:$0xff]
  %v31 = vld [vmem:[%s1 + $0x18] sm:$0xff]
  %v32 = vld [vmem:[%s2] sm:$0xff]
  %v33 = vld [vmem:[%s2 + $0x8] sm:$0xff]
  %v34 = vld [vmem:[%s2 + $0x10] sm:$0xff]
  %v35 = vld [vmem:[%s2 + $0x18] sm:$0xff]
  %37 = vset.pattern.permute.xlu0 0
  %38 = vperm.xlu0 %37, %v32
  %v39 = vpop.permute.xlu0 %38
  %42 = vset.pattern.permute.xlu0 0
  %43 = vperm.xlu0 %42, %v33
  %v44 = vpop.permute.xlu0 %43
  %47 = vset.pattern.permute.xlu0 0
  %48 = vperm.xlu0 %47, %v34
  %v49 = vpop.permute.xlu0 %48
  %52 = vset.pattern.permute.xlu0 0
  %53 = vperm.xlu0 %52, %v35
  %v54 = vpop.permute.xlu0 %53
  %vm56 = vcmask 130048
  %v58 = vsel %vm56, %v28, 0
  %v61 = vsel %vm56, %v29, 0
  %v64 = vsel %vm56, %v30, 0
  %v67 = vsel %vm56, %v31, 0
  %69 = vmatprep.subr.mxu0 0.0
  %70 = vmatpush1.msra.mxu0 %v26
  %71 = vmatprep.subr.mxu0 0.0
  %72 = vmatpush1.msra.mxu0 %v27
  %73 = vmatprep.subr.mxu0 0.0
  %74 = vmatpush1.msra.mxu0 0.0
  %75 = vmatprep.subr.mxu0 0.0
  %76 = vmatpush1.msra.mxu0 0.0
  %77 = vmatprep.subr.mxu0 0.0
  %78 = vmatpush1.msra.mxu0 0.0
  %79 = vmatprep.subr.mxu0 0.0
  %80 = vmatpush1.msra.mxu0 0.0
  %81 = vmatprep.subr.mxu0 0.0
  %82 = vmatpush1.msra.mxu0 0.0
  %83 = vmatprep.subr.mxu0 0.0
  %84 = vmatpush1.msra.mxu0 0.0
  %85 = vmatprep.subr.mxu0 0.0
  %86 = vmatpush1.msra.mxu0 0.0
  %87 = vmatprep.subr.mxu0 0.0
  %88 = vmatpush1.msra.mxu0 0.0
  %89 = vmatprep.subr.mxu0 0.0
  %90 = vmatpush1.msra.mxu0 0.0
  %91 = vmatprep.subr.mxu0 0.0
  %92 = vmatpush1.msra.mxu0 0.0
  %93 = vmatprep.subr.mxu0 0.0
  %94 = vmatpush1.msra.mxu0 0.0
  %95 = vmatprep.subr.mxu0 0.0
  %96 = vmatpush1.msra.mxu0 0.0
  %97 = vmatprep.subr.mxu0 0.0
  %98 = vmatpush1.msra.mxu0 0.0
  %99 = vmatprep.subr.mxu0 0.0
  %100 = vmatpush1.msra.mxu0 0.0
  %101 = vmatprep.subr.mxu0 0.0
  %102 = vmatpush1.msra.mxu0 0.0
  %103 = vmatprep.subr.mxu0 0.0
  %104 = vmatpush1.msra.mxu0 0.0
  %105 = vmatprep.subr.mxu0 0.0
  %106 = vmatpush1.msra.mxu0 0.0
  %107 = vmatprep.subr.mxu0 0.0
  %108 = vmatpush1.msra.mxu0 0.0
  %109 = vmatprep.subr.mxu0 0.0
  %110 = vmatpush1.msra.mxu0 0.0
  %111 = vmatprep.subr.mxu0 0.0
  %112 = vmatpush1.msra.mxu0 0.0
  %113 = vmatprep.subr.mxu0 0.0
  %114 = vmatpush1.msra.mxu0 0.0
  %115 = vmatprep.subr.mxu0 0.0
  %116 = vmatpush1.msra.mxu0 0.0
  %117 = vmatprep.subr.mxu0 0.0
  %118 = vmatpush1.msra.mxu0 0.0
  %119 = vmatprep.subr.mxu0 0.0
  %120 = vmatpush1.msra.mxu0 0.0
  %121 = vmatprep.subr.mxu0 0.0
  %122 = vmatpush1.msra.mxu0 0.0
  %123 = vmatprep.subr.mxu0 0.0
  %124 = vmatpush1.msra.mxu0 0.0
  %125 = vmatprep.subr.mxu0 0.0
  %126 = vmatpush1.msra.mxu0 0.0
  %127 = vmatprep.subr.mxu0 0.0
  %128 = vmatpush1.msra.mxu0 0.0
  %129 = vmatprep.subr.mxu0 0.0
  %130 = vmatpush1.msra.mxu0 0.0
  %131 = vmatprep.subr.mxu0 0.0
  %132 = vmatpush1.msra.mxu0 0.0
  %133 = vmatprep.mubr.f32.mxu0 0.0
  %134 = vmatmul.mubr.f32.gmra.mrb[0].mxu0 %v58
  %v135 = vpop.f32.mrb[0].mxu0
  %v136 = vadd.f32 %v39, %v135
  %v137 = vpop.f32.mrb[0].mxu0
  %138 = vmatprep.mubr.f32.mxu0 0.0
  %139 = vmatmul.mubr.f32.gmra.mrb[0].mxu0 %v61
  %v140 = vpop.f32.mrb[0].mxu0
  %v141 = vadd.f32 %v44, %v140
  %v142 = vpop.f32.mrb[0].mxu0
  %143 = vmatprep.mubr.f32.mxu0 0.0
  %144 = vmatmul.mubr.f32.gmra.mrb[0].mxu0 %v64
  %v145 = vpop.f32.mrb[0].mxu0
  %v146 = vadd.f32 %v49, %v145
  %v147 = vpop.f32.mrb[0].mxu0
  %148 = vmatprep.mubr.f32.mxu0 0.0
  %149 = vmatmul.mubr.f32.gmra.mrb[0].mxu0 %v67
  %v150 = vpop.f32.mrb[0].mxu0
  %v151 = vadd.f32 %v54, %v150
  %v152 = vpop.f32.mrb[0].mxu0
  %153 = vdwg.mxu0
  %v154 = vmax.f32 %v136, 0.0
  %v155 = vmax.f32 %v141, 0.0
  %v156 = vmax.f32 %v146, 0.0
  %v157 = vmax.f32 %v151, 0.0
  %v158 = vld [vmem:[%s3] sm:$0xff]
  %v159 = vld [vmem:[%s3 + $0x8] sm:$0xff]
  %v160 = vld [vmem:[%s3 + $0x10] sm:$0xff]
  %v161 = vld [vmem:[%s3 + $0x18] sm:$0xff]
  %v162 = vld [vmem:[%s4] sm:$0xff]
  %v163 = vld [vmem:[%s4 + $0x8] sm:$0xff]
  %v164 = vld [vmem:[%s4 + $0x10] sm:$0xff]
  %v165 = vld [vmem:[%s4 + $0x18] sm:$0xff]
  %167 = vset.pattern.permute.xlu0 0
  %168 = vperm.xlu0 %167, %v162
  %v169 = vpop.permute.xlu0 %168
  %172 = vset.pattern.permute.xlu0 0
  %173 = vperm.xlu0 %172, %v163
  %v174 = vpop.permute.xlu0 %173
  %177 = vset.pattern.permute.xlu0 0
  %178 = vperm.xlu0 %177, %v164
  %v179 = vpop.permute.xlu0 %178
  %182 = vset.pattern.permute.xlu0 0
  %183 = vperm.xlu0 %182, %v165
  %v184 = vpop.permute.xlu0 %183
  %vm186 = vcmask 261120
  %v188 = vsel %vm186, %v158, 0
  %v191 = vsel %vm186, %v159, 0
  %v194 = vsel %vm186, %v160, 0
  %v197 = vsel %vm186, %v161, 0
  %199 = vmatprep.subr.mxu0 0.0
  %200 = vmatpush1.msra.mxu0 %v154
  %201 = vmatprep.subr.mxu0 0.0
  %202 = vmatpush1.msra.mxu0 %v155
  %203 = vmatprep.subr.mxu0 0.0
  %204 = vmatpush1.msra.mxu0 %v156
  %205 = vmatprep.subr.mxu0 0.0
  %206 = vmatpush1.msra.mxu0 %v157
  %207 = vmatprep.subr.mxu0 0.0
  %208 = vmatpush1.msra.mxu0 0.0
  %209 = vmatprep.subr.mxu0 0.0
  %210 = vmatpush1.msra.mxu0 0.0
  %211 = vmatprep.subr.mxu0 0.0
  %212 = vmatpush1.msra.mxu0 0.0
  %213 = vmatprep.subr.mxu0 0.0
  %214 = vmatpush1.msra.mxu0 0.0
  %215 = vmatprep.subr.mxu0 0.0
  %216 = vmatpush1.msra.mxu0 0.0
  %217 = vmatprep.subr.mxu0 0.0
  %218 = vmatpush1.msra.mxu0 0.0
  %219 = vmatprep.subr.mxu0 0.0
  %220 = vmatpush1.msra.mxu0 0.0
  %221 = vmatprep.subr.mxu0 0.0
  %222 = vmatpush1.msra.mxu0 0.0
  %223 = vmatprep.subr.mxu0 0.0
  %224 = vmatpush1.msra.mxu0 0.0
  %225 = vmatprep.subr.mxu0 0.0
  %226 = vmatpush1.msra.mxu0 0.0
  %227 = vmatprep.subr.mxu0 0.0
  %228 = vmatpush1.msra.mxu0 0.0
  %229 = vmatprep.subr.mxu0 0.0
  %230 = vmatpush1.msra.mxu0 0.0
  %231 = vmatprep.subr.mxu0 0.0
  %232 = vmatpush1.msra.mxu0 0.0
  %233 = vmatprep.subr.mxu0 0.0
  %234 = vmatpush1.msra.mxu0 0.0
  %235 = vmatprep.subr.mxu0 0.0
  %236 = vmatpush1.msra.mxu0 0.0
  %237 = vmatprep.subr.mxu0 0.0
  %238 = vmatpush1.msra.mxu0 0.0
  %239 = vmatprep.subr.mxu0 0.0
  %240 = vmatpush1.msra.mxu0 0.0
  %241 = vmatprep.subr.mxu0 0.0
  %242 = vmatpush1.msra.mxu0 0.0
  %243 = vmatprep.subr.mxu0 0.0
  %244 = vmatpush1.msra.mxu0 0.0
  %245 = vmatprep.subr.mxu0 0.0
  %246 = vmatpush1.msra.mxu0 0.0
  %247 = vmatprep.subr.mxu0 0.0
  %248 = vmatpush1.msra.mxu0 0.0
  %249 = vmatprep.subr.mxu0 0.0
  %250 = vmatpush1.msra.mxu0 0.0
  %251 = vmatprep.subr.mxu0 0.0
  %252 = vmatpush1.msra.mxu0 0.0
  %253 = vmatprep.subr.mxu0 0.0
  %254 = vmatpush1.msra.mxu0 0.0
  %255 = vmatprep.subr.mxu0 0.0
  %256 = vmatpush1.msra.mxu0 0.0
  %257 = vmatprep.subr.mxu0 0.0
  %258 = vmatpush1.msra.mxu0 0.0
  %259 = vmatprep.subr.mxu0 0.0
  %260 = vmatpush1.msra.mxu0 0.0
  %261 = vmatprep.subr.mxu0 0.0
  %262 = vmatpush1.msra.mxu0 0.0
  %263 = vmatprep.mubr.f32.mxu0 0.0
  %264 = vmatmul.mubr.f32.gmra.mrb[0].mxu0 %v188
  %v265 = vpop.f32.mrb[0].mxu0
  %v266 = vadd.f32 %v169, %v265
  %v267 = vpop.f32.mrb[0].mxu0
  %268 = vmatprep.mubr.f32.mxu0 0.0
  %269 = vmatmul.mubr.f32.gmra.mrb[0].mxu0 %v191
  %v270 = vpop.f32.mrb[0].mxu0
  %v271 = vadd.f32 %v174, %v270
  %v272 = vpop.f32.mrb[0].mxu0
  %273 = vmatprep.mubr.f32.mxu0 0.0
  %274 = vmatmul.mubr.f32.gmra.mrb[0].mxu0 %v194
  %v275 = vpop.f32.mrb[0].mxu0
  %v276 = vadd.f32 %v179, %v275
  %v277 = vpop.f32.mrb[0].mxu0
  %278 = vmatprep.mubr.f32.mxu0 0.0
  %279 = vmatmul.mubr.f32.gmra.mrb[0].mxu0 %v197
  %v280 = vpop.f32.mrb[0].mxu0
  %v281 = vadd.f32 %v184, %v280
  %v282 = vpop.f32.mrb[0].mxu0
  %283 = vdwg.mxu0
  %v284 = vmax.f32 %v266, 0.0
  %v285 = vmax.f32 %v271, 0.0
  %v286 = vmax.f32 %v276, 0.0
  %v287 = vmax.f32 %v281, 0.0
  %v288 = vld [vmem:[%s5] sm:$0xff]
  %v289 = vld [vmem:[%s5 + $0x8] sm:$0xff]
  %v290 = vld [vmem:[%s6] sm:$0xff]
  %v291 = vld [vmem:[%s6 + $0x8] sm:$0xff]
  %293 = vset.pattern.permute.xlu0 0
  %294 = vperm.xlu0 %293, %v290
  %v295 = vpop.permute.xlu0 %294
  %298 = vset.pattern.permute.xlu0 0
  %299 = vperm.xlu0 %298, %v291
  %v300 = vpop.permute.xlu0 %299
  %v303 = vsel %vm186, %v288, 0
  %v306 = vsel %vm186, %v289, 0
  %308 = vmatprep.subr.mxu0 0.0
  %309 = vmatpush1.msra.mxu0 %v284
  %310 = vmatprep.subr.mxu0 0.0
  %311 = vmatpush1.msra.mxu0 %v285
  %312 = vmatprep.subr.mxu0 0.0
  %313 = vmatpush1.msra.mxu0 %v286
  %314 = vmatprep.subr.mxu0 0.0
  %315 = vmatpush1.msra.mxu0 %v287
  %316 = vmatprep.subr.mxu0 0.0
  %317 = vmatpush1.msra.mxu0 0.0
  %318 = vmatprep.subr.mxu0 0.0
  %319 = vmatpush1.msra.mxu0 0.0
  %320 = vmatprep.subr.mxu0 0.0
  %321 = vmatpush1.msra.mxu0 0.0
  %322 = vmatprep.subr.mxu0 0.0
  %323 = vmatpush1.msra.mxu0 0.0
  %324 = vmatprep.subr.mxu0 0.0
  %325 = vmatpush1.msra.mxu0 0.0
  %326 = vmatprep.subr.mxu0 0.0
  %327 = vmatpush1.msra.mxu0 0.0
  %328 = vmatprep.subr.mxu0 0.0
  %329 = vmatpush1.msra.mxu0 0.0
  %330 = vmatprep.subr.mxu0 0.0
  %331 = vmatpush1.msra.mxu0 0.0
  %332 = vmatprep.subr.mxu0 0.0
  %333 = vmatpush1.msra.mxu0 0.0
  %334 = vmatprep.subr.mxu0 0.0
  %335 = vmatpush1.msra.mxu0 0.0
  %336 = vmatprep.subr.mxu0 0.0
  %337 = vmatpush1.msra.mxu0 0.0
  %338 = vmatprep.subr.mxu0 0.0
  %339 = vmatpush1.msra.mxu0 0.0
  %340 = vmatprep.subr.mxu0 0.0
  %341 = vmatpush1.msra.mxu0 0.0
  %342 = vmatprep.subr.mxu0 0.0
  %343 = vmatpush1.msra.mxu0 0.0
  %344 = vmatprep.subr.mxu0 0.0
  %345 = vmatpush1.msra.mxu0 0.0
  %346 = vmatprep.subr.mxu0 0.0
  %347 = vmatpush1.msra.mxu0 0.0
  %348 = vmatprep.subr.mxu0 0.0
  %349 = vmatpush1.msra.mxu0 0.0
  %350 = vmatprep.subr.mxu0 0.0
  %351 = vmatpush1.msra.mxu0 0.0
  %352 = vmatprep.subr.mxu0 0.0
  %353 = vmatpush1.msra.mxu0 0.0
  %354 = vmatprep.subr.mxu0 0.0
  %355 = vmatpush1.msra.mxu0 0.0
  %356 = vmatprep.subr.mxu0 0.0
  %357 = vmatpush1.msra.mxu0 0.0
  %358 = vmatprep.subr.mxu0 0.0
  %359 = vmatpush1.msra.mxu0 0.0
  %360 = vmatprep.subr.mxu0 0.0
  %361 = vmatpush1.msra.mxu0 0.0
  %362 = vmatprep.subr.mxu0 0.0
  %363 = vmatpush1.msra.mxu0 0.0
  %364 = vmatprep.subr.mxu0 0.0
  %365 = vmatpush1.msra.mxu0 0.0
  %366 = vmatprep.subr.mxu0 0.0
  %367 = vmatpush1.msra.mxu0 0.0
  %368 = vmatprep.subr.mxu0 0.0
  %369 = vmatpush1.msra.mxu0 0.0
  %370 = vmatprep.subr.mxu0 0.0
  %371 = vmatpush1.msra.mxu0 0.0
  %372 = vmatprep.mubr.f32.mxu0 0.0
  %373 = vmatmul.mubr.f32.gmra.mrb[0].mxu0 %v303
  %v374 = vpop.f32.mrb[0].mxu0
  %v375 = vadd.f32 %v295, %v374
  %v376 = vpop.f32.mrb[0].mxu0
  %377 = vmatprep.mubr.f32.mxu0 0.0
  %378 = vmatmul.mubr.f32.gmra.mrb[0].mxu0 %v306
  %v379 = vpop.f32.mrb[0].mxu0
  %v380 = vadd.f32 %v300, %v379
  %v381 = vpop.f32.mrb[0].mxu0
  %382 = vdwg.mxu0
  %383 = vst [vmem:[%s7] sm:$0xff] %v375
  %384 = vst [vmem:[%s7 + $0x8] sm:$0xff] %v380
  // Predicated region
  $region30: #{ma_ps_dqn_forward.1} parent=0 // pred_check
    _
  $region31: #{ma_ps_dqn_forward.1} parent=0 // pred_check_branch
    %386 = sbr.rel (0) target = $region33
  $region32: #{ma_ps_dqn_forward.1} parent=0 // pred_region
    _
  $region33: #{ma_ps_dqn_forward.1} parent=0 // pred_fallthru
    _
  // Predicated region
  $region34: #{ma_ps_dqn_forward.1} parent=0 // pred_check
    _
  $region35: #{ma_ps_dqn_forward.1} parent=0 // pred_check_branch
    %388 = sbr.rel (0) target = $region37
  $region36: #{ma_ps_dqn_forward.1} parent=0 // pred_region
    _
  $region37: #{ma_ps_dqn_forward.1} parent=0 // pred_fallthru
    _

</llo_original>
